<compile_context>
chip_gen: v7x
topology: tpu7x:2x2x1
jax: 0.10.0
libtpu: 0.0.40
codegen_flags: <defaults>
</compile_context>

<pallas_src>
import dataclasses

import numpy as np
import jax
import jax.numpy as jnp
from jax.experimental import pallas as pl
from jax.experimental.pallas import tpu as pltpu


# --------------------------------------------------------------------------
# Pallas kernels
# --------------------------------------------------------------------------

def _pool_kernel(um_ref, inv_ref, x_ref, o_ref):
    # grid = (B, T_pad // t_tile); axis 1 is the frame-reduction axis.
    # um_ref : (1, Tt)  int32  frame -> unit id (1-based; 0 = dropped frame)
    # inv_ref: (U, 1)   f32    1 / clamp(count, 1)   (precomputed on host)
    # x_ref  : (Tt, C2) bf16   fused content||pitch embeddings, time-major
    # o_ref  : (U, C2)  f32    pooled (mean) unit embeddings (accumulator)
    t = pl.program_id(1)

    @pl.when(t == 0)
    def _():
        o_ref[...] = jnp.zeros_like(o_ref)

    U = o_ref.shape[0]
    Tt = um_ref.shape[1]
    unit_ids = jax.lax.broadcasted_iota(jnp.int32, (U, Tt), 0) + 1
    onehot = jnp.where(um_ref[...] == unit_ids, 1.0, 0.0).astype(jnp.bfloat16)
    o_ref[...] += jnp.dot(onehot, x_ref[...], preferred_element_type=jnp.float32)

    @pl.when(t == pl.num_programs(1) - 1)
    def _():
        o_ref[...] = o_ref[...] * inv_ref[...]


def _expand_kernel(idx_ref, x_ref, o_ref):
    # idx_ref: (Ft, 1)  int32  unit id per output frame (0 => zero pad frame)
    # x_ref  : (U, C2)  f32    unit embeddings (fused content||pitch)
    # o_ref  : (Ft, C2) f32    frame-level embeddings for this frame tile
    Ft = idx_ref.shape[0]
    U = x_ref.shape[0]
    unit_ids = jax.lax.broadcasted_iota(jnp.int32, (Ft, U), 1) + 1
    onehot = jnp.where(idx_ref[...] == unit_ids, 1.0, 0.0).astype(jnp.bfloat16)
    o_ref[...] = jnp.dot(onehot, x_ref[...].astype(jnp.bfloat16),
                         preferred_element_type=jnp.float32)


def _dp_kernel(x_ref, mcol_ref, mrow_ref, g_ref, cw_ref, w1_ref, w2_ref,
               vecs_ref, o_ref):
    # x_ref   : (U, Cin)      unit content embeddings (time-major), f32
    # mcol_ref: (U, 1)        unit mask (column form)
    # mrow_ref: (1, U)        unit mask (lane-dense row form, for the output)
    # g_ref   : (1, gin+1)    global cond augmented with a trailing 1
    # cw_ref  : (gin+1, Cin)  cond weight with bias folded in as the last row
    # w1_ref  : (3, Cin, F)   conv1 taps, bf16
    # w2_ref  : (3, F, F)     conv2 taps, bf16
    # vecs_ref: (8, F)  rows: b1, gamma1, beta1, b2, gamma2, beta2, pw, pb
    # o_ref   : (1, U)        log duration prediction (lane-dense)
    U = x_ref.shape[0]
    mask = mcol_ref[...]                                        # (U, 1)

    # boundary masks for k=3 'same' conv, built once (hoisted out of the convs)
    row = jax.lax.broadcasted_iota(jnp.int32, (U, 1), 0)
    not_first = (row >= 1).astype(jnp.float32)
    not_last = (row < U - 1).astype(jnp.float32)

    # conditioning: x = x + Linear(g)  (bias folded into augmented weight)
    cond = jnp.dot(g_ref[...], cw_ref[...],
                   preferred_element_type=jnp.float32)          # (1, Cin)
    x = (x_ref[...] + cond) * mask                              # (U, Cin)

    def conv_k3(inp, w_ref, bias_row):
        # shifts/masks act on the (narrow) input, not the (U, F) outputs.
        # NOTE: kept as 3 MXU pushes (a single stacked-K dot would need a
        # minor-dim concat whose unaligned lowering is not guaranteed).
        prev = pltpu.roll(inp, shift=1, axis=0) * not_first     # x[t-1]
        nxt = pltpu.roll(inp, shift=U - 1, axis=0) * not_last   # x[t+1]
        y = jnp.dot(prev.astype(jnp.bfloat16), w_ref[0],
                    preferred_element_type=jnp.float32)
        y = y + jnp.dot(inp.astype(jnp.bfloat16), w_ref[1],
                        preferred_element_type=jnp.float32)
        y = y + jnp.dot(nxt.astype(jnp.bfloat16), w_ref[2],
                        preferred_element_type=jnp.float32)
        return y + bias_row

    def layer_norm(h, gamma_row, beta_row):
        mu = jnp.mean(h, axis=-1, keepdims=True)
        var = jnp.mean(jnp.square(h - mu), axis=-1, keepdims=True)
        return (h - mu) * jax.lax.rsqrt(var + 1e-5) * gamma_row + beta_row

    h = conv_k3(x, w1_ref, vecs_ref[0:1, :])
    h = jnp.maximum(h, 0.0)
    h = layer_norm(h, vecs_ref[1:2, :], vecs_ref[2:3, :])
    # TODO(synk): dropout (p=0.5) treated as identity (eval mode).
    h = h * mask
    h = conv_k3(h, w2_ref, vecs_ref[3:4, :])
    h = jnp.maximum(h, 0.0)
    h = layer_norm(h, vecs_ref[4:5, :], vecs_ref[5:6, :])
    h = h * mask

    # lane-dense projection: (1,F)·(U,F)^T -> (1,U), then +bias, then mask.
    y = jax.lax.dot_general(vecs_ref[6:7, :], h, (((1,), (1,)), ((), ())),
                            preferred_element_type=jnp.float32)  # (1, U)
    o_ref[...] = (y + vecs_ref[7:8, 0:1]) * mrow_ref[...]


# --------------------------------------------------------------------------
# Pallas wrappers
# --------------------------------------------------------------------------

def _round_up(n, m):
    return max(((n + m - 1) // m) * m, m)


def unit_pooling(um1, inv_counts, x_fused):
    """um1: (B,1,T) i32; inv_counts: (B,U,1) f32; x_fused: (B,T,C2) bf16."""
    B, _, T = um1.shape
    U = inv_counts.shape[1]
    C2 = x_fused.shape[-1]

    # bound the in-register one-hot at (U, 512); pad dropped frames (um = 0)
    T_TILE = 512
    if T > T_TILE:
        T_pad, t_tile = _round_up(T, T_TILE), T_TILE
    else:
        T_pad = _round_up(T, 8)
        t_tile = T_pad
    if T_pad != T:
        um1 = jnp.pad(um1, ((0, 0), (0, 0), (0, T_pad - T)))
        x_fused = jnp.pad(x_fused, ((0, 0), (0, T_pad - T), (0, 0)))

    return pl.pallas_call(
        _pool_kernel,
        out_shape=jax.ShapeDtypeStruct((B, U, C2), jnp.float32),
        grid=(B, T_pad // t_tile),
        in_specs=[pl.BlockSpec((None, 1, t_tile), lambda b, t: (b, 0, t)),
                  pl.BlockSpec((None, U, 1), lambda b, t: (b, 0, 0)),
                  pl.BlockSpec((None, t_tile, C2), lambda b, t: (b, t, 0))],
        out_specs=pl.BlockSpec((None, U, C2), lambda b, t: (b, 0, 0)),
        compiler_params=pltpu.CompilerParams(
            dimension_semantics=("parallel", "arbitrary")),
    )(um1, inv_counts, x_fused)


def frame_expansion(idx, u_emb, f_tile):
    """idx: (B,F_pad,1) i32; u_emb: (B,U,C2) f32 -> (B,F_pad,C2) f32."""
    B, F_pad, _ = idx.shape
    U, C2 = u_emb.shape[1], u_emb.shape[2]
    grid = (B, F_pad // f_tile)
    return pl.pallas_call(
        _expand_kernel,
        out_shape=jax.ShapeDtypeStruct((B, F_pad, C2), jnp.float32),
        grid=grid,
        in_specs=[pl.BlockSpec((None, f_tile, 1), lambda b, f: (b, f, 0)),
                  pl.BlockSpec((None, U, C2), lambda b, f: (b, 0, 0))],
        out_specs=pl.BlockSpec((None, f_tile, C2), lambda b, f: (b, f, 0)),
        compiler_params=pltpu.CompilerParams(
            dimension_semantics=("parallel", "parallel"),
            vmem_limit_bytes=32 * 1024 * 1024),  # tiles sized to fit v7x 64MiB
    )(idx, u_emb)


def duration_predictor(u_emb_c, u_mask, g, params):
    """u_emb_c: (B,U,Cin) f32; u_mask: (B,U) bool; g: (B,gin,1) -> (B,U) f32."""
    B, U, Cin = u_emb_c.shape
    F = params["w1"].shape[-1]
    gin = params["cond_w"].shape[0]

    m = jnp.asarray(u_mask, jnp.float32)
    m_col = m[:, :, None]                                            # (B, U, 1)
    m_row = m[:, None, :]                                            # (B, 1, U)
    g_tm = jnp.transpose(jnp.asarray(g, jnp.float32), (0, 2, 1))     # (B, 1, gin)
    g_aug = jnp.concatenate([g_tm, jnp.ones((B, 1, 1), jnp.float32)], axis=-1)
    cw_aug = jnp.concatenate([params["cond_w"], params["cond_b"]], axis=0)
    w1 = params["w1"].astype(jnp.bfloat16)
    w2 = params["w2"].astype(jnp.bfloat16)
    vecs = jnp.stack([
        params["b1"][0], params["gamma1"][0], params["beta1"][0],
        params["b2"][0], params["gamma2"][0], params["beta2"][0],
        params["pw"][:, 0],
        jnp.full((F,), params["pb"][0, 0], jnp.float32),
    ], axis=0).astype(jnp.float32)

    gin1 = gin + 1
    in_specs = [
        pl.BlockSpec((None, U, Cin), lambda b: (b, 0, 0)),
        pl.BlockSpec((None, U, 1), lambda b: (b, 0, 0)),
        pl.BlockSpec((None, 1, U), lambda b: (b, 0, 0)),
        pl.BlockSpec((None, 1, gin1), lambda b: (b, 0, 0)),
        pl.BlockSpec((gin1, Cin), lambda b: (0, 0)),
        pl.BlockSpec((3, Cin, F), lambda b: (0, 0, 0)),
        pl.BlockSpec((3, F, F), lambda b: (0, 0, 0)),
        pl.BlockSpec((8, F), lambda b: (0, 0)),
    ]
    out = pl.pallas_call(
        _dp_kernel,
        out_shape=jax.ShapeDtypeStruct((B, 1, U), jnp.float32),
        grid=(B,),
        in_specs=in_specs,
        out_specs=pl.BlockSpec((None, 1, U), lambda b: (b, 0, 0)),
        compiler_params=pltpu.CompilerParams(
            dimension_semantics=("parallel",)),
    )(u_emb_c, m_col, m_row, g_aug, cw_aug, w1, w2, vecs)
    return out[:, 0, :]                                              # (B, U)


# --------------------------------------------------------------------------
# Data-dependent glue (eager numpy) — matches the PyTorch reference semantics.
# --------------------------------------------------------------------------

def deduplicate(ph):
    """ph: (B, T) int -> (units (B, U_pad), durations (B, U_pad)) int64."""
    units_list, dur_list = [], []
    for row in ph:
        diff = np.concatenate([[True], row[1:] != row[:-1]])
        units_list.append(row[diff])
        idx = np.concatenate([np.nonzero(diff)[0], [len(row)]])
        dur_list.append(idx[1:] - idx[:-1])
    max_len = max(len(u) for u in units_list)
    U_pad = _round_up(max_len, 128)        # lane-friendly padding, masked out
    units = np.zeros((len(units_list), U_pad), np.int64)
    durs = np.zeros((len(units_list), U_pad), np.int64)
    for i, (u, d) in enumerate(zip(units_list, dur_list)):
        units[i, :len(u)] = u
        durs[i, :len(d)] = d
    return units, durs


def get_unit_mapping(d):
    """d: (B, U) int -> unit mapping (B, T) int64 (unit indices start at 1)."""
    d = np.asarray(d, dtype=np.int64)
    B, U = d.shape
    cum = np.cumsum(d, axis=1)
    cum_prev = np.concatenate([np.zeros((B, 1), np.int64), cum[:, :-1]], axis=1)
    T = int(cum[:, -1].max())
    pos = np.arange(T)[None, None, :]
    unit_idx = np.arange(1, U + 1)[None, :, None]
    token_mask = (pos >= cum_prev[:, :, None]) & (pos < cum[:, :, None])
    return (unit_idx * token_mask.astype(np.int64)).sum(1)


def linear_interpolate(x, new_len):
    """PyTorch F.interpolate(mode='linear', align_corners=False) on last axis."""
    x = np.asarray(x, dtype=np.float32)
    B, C, T = x.shape
    scale = T / new_len
    pos = (np.arange(new_len, dtype=np.float64) + 0.5) * scale - 0.5
    pos = np.clip(pos, 0.0, T - 1)
    i0 = np.floor(pos).astype(np.int64)
    i1 = np.minimum(i0 + 1, T - 1)
    w = (pos - i0).astype(np.float32)
    return x[:, :, i0] * (1.0 - w) + x[:, :, i1] * w


# --------------------------------------------------------------------------
# DurationControl forward
# --------------------------------------------------------------------------

@dataclasses.dataclass
class DDDMInput:
    phonemes: np.ndarray      # (B, T) int
    mask: np.ndarray          # (B, 1, T) bool
    emb_content: jnp.ndarray  # (B, C, T) f32
    emb_pitch: jnp.ndarray    # (B, C, T) f32
    mel: jnp.ndarray          # (B, n_mel, T) f32


def init_duration_control_params(key, in_dim, gin_channels, filter_channels=256):
    ks = jax.random.split(key, 4)
    s = 0.1
    f32 = jnp.float32
    return dict(
        cond_w=s * jax.random.normal(ks[0], (gin_channels, in_dim), f32),
        cond_b=jnp.zeros((1, in_dim), f32),
        w1=s * jax.random.normal(ks[1], (3, in_dim, filter_channels), f32),
        b1=jnp.zeros((1, filter_channels), f32),
        gamma1=jnp.ones((1, filter_channels), f32),
        beta1=jnp.zeros((1, filter_channels), f32),
        w2=s * jax.random.normal(ks[2], (3, filter_channels, filter_channels), f32),
        b2=jnp.zeros((1, filter_channels), f32),
        gamma2=jnp.ones((1, filter_channels), f32),
        beta2=jnp.zeros((1, filter_channels), f32),
        pw=s * jax.random.normal(ks[3], (filter_channels, 1), f32),
        pb=jnp.zeros((1, 1), f32),
    )


def duration_control_forward(x: DDDMInput, g, params):
    """g: (B, gin, 1).  Returns updated DDDMInput (return_loss=False branch)."""
    # TODO(synk): return_loss branch (L1 loss on log durations) not implemented.
    B, C, T_ph = x.emb_content.shape

    # --- dedup + unit mapping (data-dependent, eager) ---
    ph = np.asarray(x.phonemes) * np.asarray(x.mask)[:, 0, :].astype(np.int64)
    units, dur = deduplicate(ph)                      # (B, U_pad)
    um1 = get_unit_mapping(dur)                       # (B, T_ph)
    u_mask = (units != 0)                             # (B, U_pad) bool

    um1_j = jnp.asarray(um1[:, None, :].astype(np.int32))            # (B, 1, T)
    inv_counts = jnp.asarray(
        (1.0 / np.maximum(dur, 1)).astype(np.float32)[:, :, None])   # (B, U, 1)

    # --- fused content||pitch, time-major, bf16 for the MXU ---
    x_fused = jnp.concatenate(
        [x.emb_content, x.emb_pitch], axis=1).astype(jnp.float32)    # (B, 2C, T)
    x_fused = jnp.transpose(x_fused, (0, 2, 1)).astype(jnp.bfloat16)  # (B, T, 2C)

    # --- unit pooling (Pallas, single fused call, T-tiled) ---
    u_emb = unit_pooling(um1_j, inv_counts, x_fused)                  # (B, U, 2C)

    # --- duration predictor (Pallas) on the content half ---
    log_dur = duration_predictor(u_emb[:, :, :C], jnp.asarray(u_mask),
                                 jnp.asarray(g, jnp.float32), params)
    log_dur = np.asarray(log_dur)                                     # (B, U)

    # --- new durations / mapping (eager) ---
    dur_pred = np.ceil(np.exp(log_dur) * u_mask.astype(np.float32))
    um2 = get_unit_mapping(dur_pred.astype(np.int64))                 # (B, new_len)
    new_len = um2.shape[1]
    if new_len > 512:
        f_tile = 512
        F_pad = _round_up(new_len, 512)
    else:
        F_pad = _round_up(new_len, 8)
        f_tile = F_pad
    idx = np.zeros((B, F_pad, 1), np.int32)
    idx[:, :new_len, 0] = um2
    idx = jnp.asarray(idx)

    # --- frame expansion (Pallas, single fused call, F-tiled) ---
    emb_new = frame_expansion(idx, u_emb, f_tile)[:, :new_len, :]     # (B, L, 2C)
    emb_new_ct = jnp.transpose(emb_new, (0, 2, 1))                    # (B, 2C, L)

    x.mask = jnp.asarray((um2 != 0)[:, None, :])                      # (B, 1, L)
    x.emb_content = emb_new_ct[:, :C, :]
    x.emb_pitch = emb_new_ct[:, C:, :]
    x.mel = jnp.asarray(linear_interpolate(x.mel, new_len))           # (B, n_mel, L)
    return x


# --------------------------------------------------------------------------
# Demo
# --------------------------------------------------------------------------

if __name__ == "__main__":
    B, T_ph, in_dim, gin, n_mel = 2, 16, 64, 32, 80

    key = jax.random.PRNGKey(0)
    k_c, k_p, k_m, k_g, k_params = jax.random.split(key, 5)

    phonemes = np.array(
        [[1, 1, 2, 2, 2, 3, 4, 4, 5, 5, 5, 5, 6, 7, 7, 7],
         [2, 2, 2, 3, 3, 1, 1, 1, 1, 4, 4, 5, 5, 6, 6, 6]], dtype=np.int64)
    mask = np.ones((B, 1, T_ph), dtype=bool)
    mask[1, 0, 12:] = False   # second sample is shorter

    dddm_in = DDDMInput(
        phonemes=phonemes,
        mask=mask,
        emb_content=jax.random.normal(k_c, (B, in_dim, T_ph), jnp.float32),
        emb_pitch=jax.random.normal(k_p, (B, in_dim, T_ph), jnp.float32),
        mel=jax.random.normal(k_m, (B, n_mel, T_ph), jnp.float32),
    )
    g = jax.random.normal(k_g, (B, gin, 1), jnp.float32)

    params = init_duration_control_params(k_params, in_dim, gin)

    out = duration_control_forward(dddm_in, g, params)

    jax.block_until_ready(out.emb_content)
    jax.block_until_ready(out.emb_pitch)
    jax.block_until_ready(out.mask)
    jax.block_until_ready(out.mel)

    assert out.emb_content.shape[0] == B
    assert out.emb_content.shape[1] == in_dim
    assert out.emb_content.shape[2] == out.mask.shape[2] == out.mel.shape[2]
    assert out.emb_pitch.shape == out.emb_content.shape
    print("KERNEL_OK")
</pallas_src>

<mosaic_0001>
module attributes {stable_mosaic.version = 11 : i64} {
  func.func @_pool_kernel(%arg0: i32, %arg1: i32, %arg2: memref<1x1x16xi32, #tpu.memory_space<vmem>>, %arg3: memref<1x128x1xf32, #tpu.memory_space<vmem>>, %arg4: memref<1x16x128xbf16, #tpu.memory_space<vmem>>, %arg5: memref<1x128x128xf32, #tpu.memory_space<vmem>>) attributes {dimension_semantics = [#tpu.dimension_semantics<parallel>, #tpu.dimension_semantics<arbitrary>], iteration_bounds = array<i64: 2, 1>, scalar_prefetch = 0 : i64, scratch_operands = 0 : i64, tpu.core_type = #tpu.core_type<tc>, window_params = [{transform_indices = @transform_0, window_bounds = array<i64: 1, 1, 16>}, {transform_indices = @transform_1, window_bounds = array<i64: 1, 128, 1>}, {transform_indices = @transform_2, window_bounds = array<i64: 1, 16, 128>}, {transform_indices = @transform_3, window_bounds = array<i64: 1, 128, 128>}]} {
    %c0_i32 = arith.constant 0 : i32
    %0 = arith.cmpi eq, %arg1, %c0_i32 : i32
    %1 = arith.extui %0 : i1 to i32
    %c0_i32_0 = arith.constant 0 : i32
    %2 = arith.cmpi ne, %1, %c0_i32_0 : i32
    scf.if %2 {
      %cst_16 = arith.constant 0.000000e+00 : f32
      %26 = vector.broadcast %cst_16 : f32 to vector<128x128xf32>
      %c0_17 = arith.constant 0 : index
      %c0_18 = arith.constant 0 : index
      %c0_19 = arith.constant 0 : index
      %27 = vector.load %arg5[%c0_17, %c0_18, %c0_19] : memref<1x128x128xf32, #tpu.memory_space<vmem>>, vector<1x128x128xf32>
      %28 = vector.shape_cast %27 : vector<1x128x128xf32> to vector<128x128xf32>
      %29 = vector.shape_cast %26 : vector<128x128xf32> to vector<1x128x128xf32>
      tpu.vector_store %arg5[%c0_17, %c0_18, %c0_19], %29 {strides = array<i32>} : memref<1x128x128xf32, #tpu.memory_space<vmem>>, vector<1x128x128xf32>,
    } else {
    }
    %3 = tpu.iota {dimensions = array<i32: 0>} : vector<128x16xi32>
    %c1_i32 = arith.constant 1 : i32
    %4 = vector.broadcast %c1_i32 : i32 to vector<128x16xi32>
    %5 = arith.addi %3, %4 : vector<128x16xi32>
    %c0 = arith.constant 0 : index
    %c0_1 = arith.constant 0 : index
    %c0_2 = arith.constant 0 : index
    %6 = vector.load %arg2[%c0, %c0_1, %c0_2] : memref<1x1x16xi32, #tpu.memory_space<vmem>>, vector<1x1x16xi32>
    %7 = vector.shape_cast %6 : vector<1x1x16xi32> to vector<1x16xi32>
    %8 = vector.broadcast %7 : vector<1x16xi32> to vector<128x16xi32>
    %9 = arith.cmpi eq, %8, %5 : vector<128x16xi32>
    %cst = arith.constant 1.000000e+00 : f32
    %cst_3 = arith.constant 0.000000e+00 : f32
    %10 = vector.broadcast %cst : f32 to vector<128x16xf32>
    %11 = vector.broadcast %cst_3 : f32 to vector<128x16xf32>
    %12 = arith.select %9, %10, %11 : vector<128x16xi1>, vector<128x16xf32>
    %13 = arith.truncf %12 : vector<128x16xf32> to vector<128x16xbf16>
    %c0_4 = arith.constant 0 : index
    %c0_5 = arith.constant 0 : index
    %c0_6 = arith.constant 0 : index
    %14 = vector.load %arg5[%c0_4, %c0_5, %c0_6] : memref<1x128x128xf32, #tpu.memory_space<vmem>>, vector<1x128x128xf32>
    %15 = vector.shape_cast %14 : vector<1x128x128xf32> to vector<128x128xf32>
    %c0_7 = arith.constant 0 : index
    %c0_8 = arith.constant 0 : index
    %c0_9 = arith.constant 0 : index
    %16 = vector.load %arg4[%c0_7, %c0_8, %c0_9] : memref<1x16x128xbf16, #tpu.memory_space<vmem>>, vector<1x16x128xbf16>
    %17 = vector.shape_cast %16 : vector<1x16x128xbf16> to vector<16x128xbf16>
    %cst_10 = arith.constant dense<0.000000e+00> : vector<128x128xf32>
    %18 = tpu.matmul %13, %17, %cst_10 {dimension_numbers = #tpu.dot_dimension_numbers<[1], [0], [0], [1], [0, 0, 1, 1], [], []>} : vector<128x16xbf16>, vector<16x128xbf16>, vector<128x128xf32> -> vector<128x128xf32>
    %19 = arith.addf %15, %18 : vector<128x128xf32>
    %c0_11 = arith.constant 0 : index
    %c0_12 = arith.constant 0 : index
    %c0_13 = arith.constant 0 : index
    %20 = vector.load %arg5[%c0_11, %c0_12, %c0_13] : memref<1x128x128xf32, #tpu.memory_space<vmem>>, vector<1x128x128xf32>
    %21 = vector.shape_cast %20 : vector<1x128x128xf32> to vector<128x128xf32>
    %22 = vector.shape_cast %19 : vector<128x128xf32> to vector<1x128x128xf32>
    tpu.vector_store %arg5[%c0_11, %c0_12, %c0_13], %22 {strides = array<i32>} : memref<1x128x128xf32, #tpu.memory_space<vmem>>, vector<1x128x128xf32>,
    %c0_i32_14 = arith.constant 0 : i32
    %23 = arith.cmpi eq, %arg1, %c0_i32_14 : i32
    %24 = arith.extui %23 : i1 to i32
    %c0_i32_15 = arith.constant 0 : i32
    %25 = arith.cmpi ne, %24, %c0_i32_15 : i32
    scf.if %25 {
      %c0_16 = arith.constant 0 : index
      %c0_17 = arith.constant 0 : index
      %c0_18 = arith.constant 0 : index
      %26 = vector.load %arg5[%c0_16, %c0_17, %c0_18] : memref<1x128x128xf32, #tpu.memory_space<vmem>>, vector<1x128x128xf32>
      %27 = vector.shape_cast %26 : vector<1x128x128xf32> to vector<128x128xf32>
      %c0_19 = arith.constant 0 : index
      %c0_20 = arith.constant 0 : index
      %c0_21 = arith.constant 0 : index
      %28 = vector.load %arg3[%c0_19, %c0_20, %c0_21] : memref<1x128x1xf32, #tpu.memory_space<vmem>>, vector<1x128x1xf32>
      %29 = vector.shape_cast %28 : vector<1x128x1xf32> to vector<128x1xf32>
      %30 = vector.broadcast %29 : vector<128x1xf32> to vector<128x128xf32>
      %31 = arith.mulf %27, %30 : vector<128x128xf32>
      %c0_22 = arith.constant 0 : index
      %c0_23 = arith.constant 0 : index
      %c0_24 = arith.constant 0 : index
      %32 = vector.load %arg5[%c0_22, %c0_23, %c0_24] : memref<1x128x128xf32, #tpu.memory_space<vmem>>, vector<1x128x128xf32>
      %33 = vector.shape_cast %32 : vector<1x128x128xf32> to vector<128x128xf32>
      %34 = vector.shape_cast %31 : vector<128x128xf32> to vector<1x128x128xf32>
      tpu.vector_store %arg5[%c0_22, %c0_23, %c0_24], %34 {strides = array<i32>} : memref<1x128x128xf32, #tpu.memory_space<vmem>>, vector<1x128x128xf32>,
    } else {
    }
    return
  }
  func.func @transform_0(%arg0: i32, %arg1: i32) -> (i32, i32, i32) {
    %c0_i32 = arith.constant 0 : i32
    %c0_i32_0 = arith.constant 0 : i32
    return %arg0, %c0_i32, %arg1 : i32, i32, i32
  }
  func.func @transform_1(%arg0: i32, %arg1: i32) -> (i32, i32, i32) {
    %c0_i32 = arith.constant 0 : i32
    %c0_i32_0 = arith.constant 0 : i32
    %c0_i32_1 = arith.constant 0 : i32
    return %arg0, %c0_i32, %c0_i32_0 : i32, i32, i32
  }
  func.func @transform_2(%arg0: i32, %arg1: i32) -> (i32, i32, i32) {
    %c0_i32 = arith.constant 0 : i32
    %c0_i32_0 = arith.constant 0 : i32
    return %arg0, %arg1, %c0_i32 : i32, i32, i32
  }
  func.func @transform_3(%arg0: i32, %arg1: i32) -> (i32, i32, i32) {
    %c0_i32 = arith.constant 0 : i32
    %c0_i32_0 = arith.constant 0 : i32
    %c0_i32_1 = arith.constant 0 : i32
    return %arg0, %c0_i32, %c0_i32_0 : i32, i32, i32
  }
}

</mosaic_0001>

<llo_original>
// kernel: tpu_custom_call.1
$region0: #{tpu_custom_call.1}
  #allocation0 [shape = 'u32[]', space=smem, size = 0x4, offset = 0x4, fixed_abs, tag = 'smem constant byte address 0x4 - core index']
  #allocation1 [shape = 'u32[144,128]{1,0:T(1,128)}', space=vmem, size = 0x12000, scoped, tag = 'internal scratch']
  %s0 = inlined_call_operand.vmem [shape: s32[2,1,16], index: 0, kind: input, shape index: {}]
  %s1 = inlined_call_operand.vmem [shape: f32[2,128,1], index: 1, kind: input, shape index: {}]
  %s2 = inlined_call_operand.vmem [shape: bf16[2,16,128], index: 2, kind: input, shape index: {}]
  %s3 = inlined_call_operand.hbm [shape: f32[2,128,128], index: 3, kind: output, shape index: {}]
  %s4 = sld [smem:[#allocation0]]
  $region53: #{tpu_custom_call.1} parent=0
    _
  %s6 = ssub.s32 1, %s4
  %s7 = scalar_select 0, %s6, %s4
  $region1: #{tpu_custom_call.1} parent=0
    #allocation2 [shape = 'u8[131072]{0}', space=vmem, size = 0x20000, scoped, tag = 'output window, operand 0']
    #allocation3 [shape = 's32[2]{0}', space=sflag, size = 0x8, scoped, tag = 'scoped memory for tpu_custom_call.1']
    %8 = vsyncpa [#allocation3], 0
    %s9 = scalar_lea.sflag [#allocation3], 1
    %10 = vsyncpa %s9, 0
    loop: start=0, step=1, limit=4
    $region2: #{tpu_custom_call.1} parent=1 // loop_pre_header
      _
    $region3: #{tpu_custom_call.1} parent=1 // loop_header
      %s12 = sphi 0, %s16
      %p13 = scmp.ge.s32.totalorder %s12, 4
      %s19 = sphi 0, %s31
      %s20 = sphi 0, %s27
      %s21 = sphi 0, %s19
      %s22 = sphi 0, %s20
      %s23 = sphi 0, %s21
      %s24 = sphi 0, %s22
      %s36 = sphi 0, %s38
      %s39 = sphi 0, %s36
      %s40 = sphi 0, %s39
      %s56 = sphi 0, %s40
      %s62 = sphi 0, %s64
      %s65 = sphi 0, %s62
      %s66 = sphi 0, %s65
      %s82 = sphi 0, %s66
      %s90 = sphi 0, %s92
      %s93 = sphi 0, %s90
      %s94 = sphi 0, %s93
      %s110 = sphi 0, %s94
      %s116 = sphi 0, %s118
      %s119 = sphi 0, %s116
      %s120 = sphi 0, %s119
      %s136 = sphi 0, %s120
    $region4: #{tpu_custom_call.1} parent=1 // loop_header_branch
      %15 = sbr.rel (%p13) target = $region8
    $region5: #{tpu_custom_call.1} parent=1 // loop_body
      %s17 = ssub.s32 %s12, 1
      %s18 = ssub.s32 %s12, 2
      %s25 = sadd.s32 1, %s20
      %p26 = scmp.ge.s32.totalorder %s25, 1
      %s27 = scalar_select %p26, 0, %s25
      %s28 = sadd.s32 1, %s19
      %s29 = scalar_select %p26, %s28, %s19
      %p30 = scmp.ge.s32.totalorder %s29, 2
      %s31 = scalar_select %p30, 0, %s29
      %s32 = ssub.s32 %s19, %s31
      %s33 = ssub.s32 %s20, %s27
      %s34 = sor.u32 %s32, %s33
      %p35 = scmp.eq.s32.totalorder %s34, 0
      %s37 = sadd.s32 %s36, 1
      %s38 = scalar_select %p35, %s36, %s37
      %p41 = pneg %p35
      %p42 = scmp.eq.s32.totalorder %s12, 1
      %p43 = por %p41, %p42
      %p44 = scmp.ne.s32.totalorder %s36, %s39
      %p45 = scmp.eq.s32.totalorder %s12, 0
      %p46 = por %p44, %p45
      %p47 = scmp.ne.s32.totalorder %s36, %s39
      %p48 = scmp.eq.s32.totalorder %s17, 1
      %p49 = por %p47, %p48
      %p50 = scmp.ne.s32.totalorder %s39, %s40
      %p51 = scmp.eq.s32.totalorder %s17, 0
      %p52 = por %p50, %p51
      %p53 = scmp.ne.s32.totalorder %s39, %s40
      %p54 = scmp.eq.s32.totalorder %s18, 1
      %p55 = por %p53, %p54
      %p57 = scmp.ne.s32.totalorder %s40, %s56
      %p58 = scmp.eq.s32.totalorder %s18, 0
      %p59 = por %p57, %p58
      %s60 = ssub.s32 %s19, %s31
      %p61 = scmp.eq.s32.totalorder %s60, 0
      %s63 = sadd.s32 %s62, 1
      %s64 = scalar_select %p61, %s62, %s63
      %p67 = pneg %p61
      %p68 = scmp.eq.s32.totalorder %s12, 1
      %p69 = por %p67, %p68
      %p70 = scmp.ne.s32.totalorder %s62, %s65
      %p71 = scmp.eq.s32.totalorder %s12, 0
      %p72 = por %p70, %p71
      %p73 = scmp.ne.s32.totalorder %s62, %s65
      %p74 = scmp.eq.s32.totalorder %s17, 1
      %p75 = por %p73, %p74
      %p76 = scmp.ne.s32.totalorder %s65, %s66
      %p77 = scmp.eq.s32.totalorder %s17, 0
      %p78 = por %p76, %p77
      %p79 = scmp.ne.s32.totalorder %s65, %s66
      %p80 = scmp.eq.s32.totalorder %s18, 1
      %p81 = por %p79, %p80
      %p83 = scmp.ne.s32.totalorder %s66, %s82
      %p84 = scmp.eq.s32.totalorder %s18, 0
      %p85 = por %p83, %p84
      %s86 = ssub.s32 %s19, %s31
      %s87 = ssub.s32 %s20, %s27
      %s88 = sor.u32 %s86, %s87
      %p89 = scmp.eq.s32.totalorder %s88, 0
      %s91 = sadd.s32 %s90, 1
      %s92 = scalar_select %p89, %s90, %s91
      %p95 = pneg %p89
      %p96 = scmp.eq.s32.totalorder %s12, 1
      %p97 = por %p95, %p96
      %p98 = scmp.ne.s32.totalorder %s90, %s93
      %p99 = scmp.eq.s32.totalorder %s12, 0
      %p100 = por %p98, %p99
      %p101 = scmp.ne.s32.totalorder %s90, %s93
      %p102 = scmp.eq.s32.totalorder %s17, 1
      %p103 = por %p101, %p102
      %p104 = scmp.ne.s32.totalorder %s93, %s94
      %p105 = scmp.eq.s32.totalorder %s17, 0
      %p106 = por %p104, %p105
      %p107 = scmp.ne.s32.totalorder %s93, %s94
      %p108 = scmp.eq.s32.totalorder %s18, 1
      %p109 = por %p107, %p108
      %p111 = scmp.ne.s32.totalorder %s94, %s110
      %p112 = scmp.eq.s32.totalorder %s18, 0
      %p113 = por %p111, %p112
      %s114 = ssub.s32 %s19, %s31
      %p115 = scmp.eq.s32.totalorder %s114, 0
      %s117 = sadd.s32 %s116, 1
      %s118 = scalar_select %p115, %s116, %s117
      %p121 = pneg %p115
      %p122 = scmp.eq.s32.totalorder %s12, 1
      %p123 = por %p121, %p122
      %p124 = scmp.ne.s32.totalorder %s116, %s119
      %p125 = scmp.eq.s32.totalorder %s12, 0
      %p126 = por %p124, %p125
      %p127 = scmp.ne.s32.totalorder %s116, %s119
      %p128 = scmp.eq.s32.totalorder %s17, 1
      %p129 = por %p127, %p128
      %p130 = scmp.ne.s32.totalorder %s119, %s120
      %p131 = scmp.eq.s32.totalorder %s17, 0
      %p132 = por %p130, %p131
      %p133 = scmp.ne.s32.totalorder %s119, %s120
      %p134 = scmp.eq.s32.totalorder %s18, 1
      %p135 = por %p133, %p134
      %p137 = scmp.ne.s32.totalorder %s120, %s136
      %p138 = scmp.eq.s32.totalorder %s18, 0
      %p139 = por %p137, %p138
      %p140 = scmp.le.s32.totalorder 1, %s12
      %p141 = scmp.lt.s32.totalorder %s12, 3
      %p142 = pnand %p140, %p141
      %p143 = pneg %p142
      // Predicated region
      $region9: #{tpu_custom_call.1} parent=5 // pred_check
        _
      $region10: #{tpu_custom_call.1} parent=5 // pred_check_branch
        %145 = sbr.rel (%p142) target = $region12
      $region11: #{tpu_custom_call.1} parent=5 // pred_region
        %s146 = ssub.s32 %s12, 1
      $region12: #{tpu_custom_call.1} parent=5 // pred_fallthru
        _
      %p147 = scmp.lt.s32.totalorder %s12, 2
      // Predicated region
      $region13: #{tpu_custom_call.1} parent=5 // pred_check
        %p148 = pneg %p147
      $region14: #{tpu_custom_call.1} parent=5 // pred_check_branch
        %150 = sbr.rel (%p148) target = $region16
      $region15: #{tpu_custom_call.1} parent=5 // pred_region
        // Predicated region
        $region17: #{tpu_custom_call.1} parent=15 // pred_check
          %p151 = pneg %p46
        $region18: #{tpu_custom_call.1} parent=15 // pred_check_branch
          %153 = sbr.rel (%p151) target = $region20
        $region19: #{tpu_custom_call.1} parent=15 // pred_region
          %p154 = scmp.lt.s32.totalorder %s19, 1
          %s155 = scalar_select %p154, %s19, 1
          %p156 = scmp.lt.s32.totalorder %s20, 0
          %s157 = scalar_select %p156, %s20, 0
          %s158 = sadd.s32 %s157, %s155
          %s159 = scalar_lea.vmem %s0, %s158
        $region20: #{tpu_custom_call.1} parent=15 // pred_fallthru
          _
        // Predicated region
        $region21: #{tpu_custom_call.1} parent=15 // pred_check
          %p160 = pneg %p72
        $region22: #{tpu_custom_call.1} parent=15 // pred_check_branch
          %162 = sbr.rel (%p160) target = $region24
        $region23: #{tpu_custom_call.1} parent=15 // pred_region
          %p163 = scmp.lt.s32.totalorder %s19, 1
          %s164 = scalar_select %p163, %s19, 1
          %s165 = smul.addr %s164, 16
          %s166 = smul.addr %s165, 8
          %s167 = scalar_lea.vmem %s1, %s166
        $region24: #{tpu_custom_call.1} parent=15 // pred_fallthru
          _
        // Predicated region
        $region25: #{tpu_custom_call.1} parent=15 // pred_check
          %p168 = pneg %p100
        $region26: #{tpu_custom_call.1} parent=15 // pred_check_branch
          %170 = sbr.rel (%p168) target = $region28
        $region27: #{tpu_custom_call.1} parent=15 // pred_region
          %s171 = smul.u32 2, %s20
          %p172 = scmp.lt.s32.totalorder %s19, 1
          %s173 = scalar_select %p172, %s19, 1
          %p174 = scmp.lt.s32.totalorder %s171, 1
          %s175 = scalar_select %p174, %s171, 1
          %s176 = smul.addr %s173, 2
          %s177 = sadd.s32 %s175, %s176
          %s178 = smul.addr %s177, 4
          %s179 = scalar_lea.vmem %s2, %s178
          %s180 = smul.u32 2, %s20
        $region28: #{tpu_custom_call.1} parent=15 // pred_fallthru
          _
      $region16: #{tpu_custom_call.1} parent=5 // pred_fallthru
        _
      %p181 = scmp.le.s32.totalorder 1, %s12
      %p182 = scmp.lt.s32.totalorder %s12, 3
      %p183 = pnand %p181, %p182
      %p184 = pneg %p183
      // Predicated region
      $region29: #{tpu_custom_call.1} parent=5 // pred_check
        _
      $region30: #{tpu_custom_call.1} parent=5 // pred_check_branch
        %186 = sbr.rel (%p183) target = $region32
      $region31: #{tpu_custom_call.1} parent=5 // pred_region
        %s187 = ssub.s32 %s12, 1
        %p188 = scmp.lt.s32.totalorder %s21, 1
        %s189 = scalar_select %p188, %s21, 1
        %p190 = scmp.lt.s32.totalorder %s22, 0
        %s191 = scalar_select %p190, %s22, 0
        %s192 = sadd.s32 %s191, %s189
        %s193 = scalar_lea.vmem %s0, %s192
        %p194 = pneg %p52
        %p195 = pneg %p49
        %p196 = scmp.lt.s32.totalorder %s21, 1
        %s197 = scalar_select %p196, %s21, 1
        %s198 = smul.addr %s197, 16
        %s199 = smul.addr %s198, 8
        %s200 = scalar_lea.vmem %s1, %s199
        %p201 = pneg %p78
        %p202 = pneg %p75
        %s203 = smul.u32 2, %s22
        %p204 = scmp.lt.s32.totalorder %s21, 1
        %s205 = scalar_select %p204, %s21, 1
        %p206 = scmp.lt.s32.totalorder %s203, 1
        %s207 = scalar_select %p206, %s203, 1
        %s208 = smul.addr %s205, 2
        %s209 = sadd.s32 %s207, %s208
        %s210 = smul.addr %s209, 4
        %s211 = scalar_lea.vmem %s2, %s210
        %p212 = pneg %p106
        %p213 = pneg %p103
        %p214 = pneg %p132
        %p215 = pneg %p129
        %s216 = sand.u32 %s119, 1
        %s217 = scalar_lea.sflag [#allocation3], %s216
        %s218 = sand.u32 %s119, 1
        %s219 = smul.addr %s218, 128
        %s220 = scalar_lea.vmem [#allocation2], %s219
        %p221 = scmp.lt.s32.totalorder %s21, 1
        %s222 = scalar_select %p221, %s21, 1
        %p223 = scmp.lt.s32.totalorder %s22, 0
        %s224 = scalar_select %p223, %s22, 0
        %s225 = sadd.s32 %s224, %s222
        %s226 = scalar_lea.vmem %s0, %s225
        %p227 = scmp.lt.s32.totalorder %s21, 1
        %s228 = scalar_select %p227, %s21, 1
        %s229 = smul.addr %s228, 16
        %s230 = smul.addr %s229, 8
        %s231 = scalar_lea.vmem %s1, %s230
        %s232 = smul.u32 2, %s22
        %p233 = scmp.lt.s32.totalorder %s21, 1
        %s234 = scalar_select %p233, %s21, 1
        %p235 = scmp.lt.s32.totalorder %s232, 1
        %s236 = scalar_select %p235, %s232, 1
        %s237 = smul.addr %s234, 2
        %s238 = sadd.s32 %s236, %s237
        %s239 = smul.addr %s238, 4
        %s240 = scalar_lea.vmem %s2, %s239
        %s241 = smul.u32 2, %s22
        %p243 = scmp.eq.s32.totalorder %s22, 0
        // Predicated region
        $region33: #{tpu_custom_call.1} parent=31 // pred_check
          %p244 = pneg %p243
        $region34: #{tpu_custom_call.1} parent=31 // pred_check_branch
          %246 = sbr.rel (%p244) target = $region36
        $region35: #{tpu_custom_call.1} parent=31 // pred_region
          %247 = vst [vmem:[%s220] sm:$0xff] 0.0
          %248 = vst [vmem:[%s220 + $0x8] sm:$0xff] 0.0
          %249 = vst [vmem:[%s220 + $0x10] sm:$0xff] 0.0
          %250 = vst [vmem:[%s220 + $0x18] sm:$0xff] 0.0
          %251 = vst [vmem:[%s220 + $0x20] sm:$0xff] 0.0
          %252 = vst [vmem:[%s220 + $0x28] sm:$0xff] 0.0
          %253 = vst [vmem:[%s220 + $0x30] sm:$0xff] 0.0
          %254 = vst [vmem:[%s220 + $0x38] sm:$0xff] 0.0
          %255 = vst [vmem:[%s220 + $0x40] sm:$0xff] 0.0
          %256 = vst [vmem:[%s220 + $0x48] sm:$0xff] 0.0
          %257 = vst [vmem:[%s220 + $0x50] sm:$0xff] 0.0
          %258 = vst [vmem:[%s220 + $0x58] sm:$0xff] 0.0
          %259 = vst [vmem:[%s220 + $0x60] sm:$0xff] 0.0
          %260 = vst [vmem:[%s220 + $0x68] sm:$0xff] 0.0
          %261 = vst [vmem:[%s220 + $0x70] sm:$0xff] 0.0
          %262 = vst [vmem:[%s220 + $0x78] sm:$0xff] 0.0
        $region36: #{tpu_custom_call.1} parent=31 // pred_fallthru
          _
        %v263 = vlaneseq
        %v264 = vshrl.u32 %v263, 7
        %v265 = vadd.s32 %v264, 8
        %v266 = vadd.s32 %v264, 16
        %v267 = vadd.s32 %v264, 24
        %v268 = vadd.s32 %v264, 32
        %v269 = vadd.s32 %v264, 40
        %v270 = vadd.s32 %v264, 48
        %v271 = vadd.s32 %v264, 56
        %v272 = vadd.s32 %v264, 64
        %v273 = vadd.s32 %v264, 72
        %v274 = vadd.s32 %v264, 80
        %v275 = vadd.s32 %v264, 88
        %v276 = vadd.s32 %v264, 96
        %v277 = vadd.s32 %v264, 104
        %v278 = vadd.s32 %v264, 112
        %v279 = vadd.s32 %v264, 120
        %v280 = vadd.s32 %v264, 1
        %v281 = vadd.s32 %v265, 1
        %v282 = vadd.s32 %v266, 1
        %v283 = vadd.s32 %v267, 1
        %v284 = vadd.s32 %v268, 1
        %v285 = vadd.s32 %v269, 1
        %v286 = vadd.s32 %v270, 1
        %v287 = vadd.s32 %v271, 1
        %v288 = vadd.s32 %v272, 1
        %v289 = vadd.s32 %v273, 1
        %v290 = vadd.s32 %v274, 1
        %v291 = vadd.s32 %v275, 1
        %v292 = vadd.s32 %v276, 1
        %v293 = vadd.s32 %v277, 1
        %v294 = vadd.s32 %v278, 1
        %v295 = vadd.s32 %v279, 1
        %v296 = vld [vmem:[%s226] sm:$0x1]
        %v297 = vlaneseq
        %v298 = vshrl.u32 %v297, 7
        %v299 = vsub.s32 0, %v298
        %v300 = vrot.slane %v296, %v299
        %vm301 = vcmp.eq.s32.totalorder %v300, %v280
        %vm302 = vcmp.eq.s32.totalorder %v300, %v281
        %vm303 = vcmp.eq.s32.totalorder %v300, %v282
        %vm304 = vcmp.eq.s32.totalorder %v300, %v283
        %vm305 = vcmp.eq.s32.totalorder %v300, %v284
        %vm306 = vcmp.eq.s32.totalorder %v300, %v285
        %vm307 = vcmp.eq.s32.totalorder %v300, %v286
        %vm308 = vcmp.eq.s32.totalorder %v300, %v287
        %vm309 = vcmp.eq.s32.totalorder %v300, %v288
        %vm310 = vcmp.eq.s32.totalorder %v300, %v289
        %vm311 = vcmp.eq.s32.totalorder %v300, %v290
        %vm312 = vcmp.eq.s32.totalorder %v300, %v291
        %vm313 = vcmp.eq.s32.totalorder %v300, %v292
        %vm314 = vcmp.eq.s32.totalorder %v300, %v293
        %vm315 = vcmp.eq.s32.totalorder %v300, %v294
        %vm316 = vcmp.eq.s32.totalorder %v300, %v295
        %v317 = vsel %vm301, 1.0, 0.0
        %v318 = vsel %vm302, 1.0, 0.0
        %v319 = vsel %vm303, 1.0, 0.0
        %v320 = vsel %vm304, 1.0, 0.0
        %v321 = vsel %vm305, 1.0, 0.0
        %v322 = vsel %vm306, 1.0, 0.0
        %v323 = vsel %vm307, 1.0, 0.0
        %v324 = vsel %vm308, 1.0, 0.0
        %v325 = vsel %vm309, 1.0, 0.0
        %v326 = vsel %vm310, 1.0, 0.0
        %v327 = vsel %vm311, 1.0, 0.0
        %v328 = vsel %vm312, 1.0, 0.0
        %v329 = vsel %vm313, 1.0, 0.0
        %v330 = vsel %vm314, 1.0, 0.0
        %v331 = vsel %vm315, 1.0, 0.0
        %v332 = vsel %vm316, 1.0, 0.0
        %v333 = vpack.c.bf16 %v318, %v317
        %v334 = vpack.c.bf16 %v320, %v319
        %v335 = vpack.c.bf16 %v322, %v321
        %v336 = vpack.c.bf16 %v324, %v323
        %v337 = vpack.c.bf16 %v326, %v325
        %v338 = vpack.c.bf16 %v328, %v327
        %v339 = vpack.c.bf16 %v330, %v329
        %v340 = vpack.c.bf16 %v332, %v331
        %v341 = vld [vmem:[%s220] sm:$0xff]
        %v342 = vld [vmem:[%s220 + $0x8] sm:$0xff]
        %v343 = vld [vmem:[%s220 + $0x10] sm:$0xff]
        %v344 = vld [vmem:[%s220 + $0x18] sm:$0xff]
        %v345 = vld [vmem:[%s220 + $0x20] sm:$0xff]
        %v346 = vld [vmem:[%s220 + $0x28] sm:$0xff]
        %v347 = vld [vmem:[%s220 + $0x30] sm:$0xff]
        %v348 = vld [vmem:[%s220 + $0x38] sm:$0xff]
        %v349 = vld [vmem:[%s220 + $0x40] sm:$0xff]
        %v350 = vld [vmem:[%s220 + $0x48] sm:$0xff]
        %v351 = vld [vmem:[%s220 + $0x50] sm:$0xff]
        %v352 = vld [vmem:[%s220 + $0x58] sm:$0xff]
        %v353 = vld [vmem:[%s220 + $0x60] sm:$0xff]
        %v354 = vld [vmem:[%s220 + $0x68] sm:$0xff]
        %v355 = vld [vmem:[%s220 + $0x70] sm:$0xff]
        %v356 = vld [vmem:[%s220 + $0x78] sm:$0xff]
        %v357 = vld [vmem:[%s240] sm:$0xf]
        %v358 = vld [vmem:[%s240 + $0x4] sm:$0xf]
        %v361 = vunpack.c.l.b16 %v357
        %v362 = vunpack.c.l.b16 %v358
        %v363 = vpack.c.b16 %v362, %v361
        %vm365 = vcmask 130048
        %v367 = vsel %vm365, %v333, 0
        %v370 = vsel %vm365, %v334, 0
        %v373 = vsel %vm365, %v335, 0
        %v376 = vsel %vm365, %v336, 0
        %v379 = vsel %vm365, %v337, 0
        %v382 = vsel %vm365, %v338, 0
        %v385 = vsel %vm365, %v339, 0
        %v388 = vsel %vm365, %v340, 0
        %390 = vmatprep.subr.bf16.mxu0 0
        %391 = vmatpush1.bf16.msra.mxu0 %v363
        %392 = vmatprep.subr.bf16.mxu0 0
        %393 = vmatpush1.bf16.msra.mxu0 0
        %394 = vmatprep.subr.bf16.mxu0 0
        %395 = vmatpush1.bf16.msra.mxu0 0
        %396 = vmatprep.subr.bf16.mxu0 0
        %397 = vmatpush1.bf16.msra.mxu0 0
        %398 = vmatprep.subr.bf16.mxu0 0
        %399 = vmatpush1.bf16.msra.mxu0 0
        %400 = vmatprep.subr.bf16.mxu0 0
        %401 = vmatpush1.bf16.msra.mxu0 0
        %402 = vmatprep.subr.bf16.mxu0 0
        %403 = vmatpush1.bf16.msra.mxu0 0
        %404 = vmatprep.subr.bf16.mxu0 0
        %405 = vmatpush1.bf16.msra.mxu0 0
        %406 = vmatprep.subr.bf16.mxu0 0
        %407 = vmatpush1.bf16.msra.mxu0 0
        %408 = vmatprep.subr.bf16.mxu0 0
        %409 = vmatpush1.bf16.msra.mxu0 0
        %410 = vmatprep.subr.bf16.mxu0 0
        %411 = vmatpush1.bf16.msra.mxu0 0
        %412 = vmatprep.subr.bf16.mxu0 0
        %413 = vmatpush1.bf16.msra.mxu0 0
        %414 = vmatprep.subr.bf16.mxu0 0
        %415 = vmatpush1.bf16.msra.mxu0 0
        %416 = vmatprep.subr.bf16.mxu0 0
        %417 = vmatpush1.bf16.msra.mxu0 0
        %418 = vmatprep.subr.bf16.mxu0 0
        %419 = vmatpush1.bf16.msra.mxu0 0
        %420 = vmatprep.subr.bf16.mxu0 0
        %421 = vmatpush1.bf16.msra.mxu0 0
        %422 = vmatprep.mubr.bf16.mxu0 0
        %423 = vmatmul.mubr.bf16.gmra.mrb[0].mxu0 %v367
        %v424 = vpop.f32.mrb[0].mxu0
        %v425 = vadd.f32 0.0, %v424
        %v426 = vpop.f32.mrb[0].mxu0
        %v427 = vpop.f32.mrb[0].mxu0
        %v428 = vadd.f32 0.0, %v427
        %v429 = vpop.f32.mrb[0].mxu0
        %430 = vmatprep.mubr.bf16.mxu0 0
        %431 = vmatmul.mubr.bf16.gmra.mrb[0].mxu0 %v370
        %v432 = vpop.f32.mrb[0].mxu0
        %v433 = vadd.f32 0.0, %v432
        %v434 = vpop.f32.mrb[0].mxu0
        %v435 = vpop.f32.mrb[0].mxu0
        %v436 = vadd.f32 0.0, %v435
        %v437 = vpop.f32.mrb[0].mxu0
        %438 = vmatprep.mubr.bf16.mxu0 0
        %439 = vmatmul.mubr.bf16.gmra.mrb[0].mxu0 %v373
        %v440 = vpop.f32.mrb[0].mxu0
        %v441 = vadd.f32 0.0, %v440
        %v442 = vpop.f32.mrb[0].mxu0
        %v443 = vpop.f32.mrb[0].mxu0
        %v444 = vadd.f32 0.0, %v443
        %v445 = vpop.f32.mrb[0].mxu0
        %446 = vmatprep.mubr.bf16.mxu0 0
        %447 = vmatmul.mubr.bf16.gmra.mrb[0].mxu0 %v376
        %v448 = vpop.f32.mrb[0].mxu0
        %v449 = vadd.f32 0.0, %v448
        %v450 = vpop.f32.mrb[0].mxu0
        %v451 = vpop.f32.mrb[0].mxu0
        %v452 = vadd.f32 0.0, %v451
        %v453 = vpop.f32.mrb[0].mxu0
        %454 = vmatprep.mubr.bf16.mxu0 0
        %455 = vmatmul.mubr.bf16.gmra.mrb[0].mxu0 %v379
        %v456 = vpop.f32.mrb[0].mxu0
        %v457 = vadd.f32 0.0, %v456
        %v458 = vpop.f32.mrb[0].mxu0
        %v459 = vpop.f32.mrb[0].mxu0
        %v460 = vadd.f32 0.0, %v459
        %v461 = vpop.f32.mrb[0].mxu0
        %462 = vmatprep.mubr.bf16.mxu0 0
        %463 = vmatmul.mubr.bf16.gmra.mrb[0].mxu0 %v382
        %v464 = vpop.f32.mrb[0].mxu0
        %v465 = vadd.f32 0.0, %v464
        %v466 = vpop.f32.mrb[0].mxu0
        %v467 = vpop.f32.mrb[0].mxu0
        %v468 = vadd.f32 0.0, %v467
        %v469 = vpop.f32.mrb[0].mxu0
        %470 = vmatprep.mubr.bf16.mxu0 0
        %471 = vmatmul.mubr.bf16.gmra.mrb[0].mxu0 %v385
        %v472 = vpop.f32.mrb[0].mxu0
        %v473 = vadd.f32 0.0, %v472
        %v474 = vpop.f32.mrb[0].mxu0
        %v475 = vpop.f32.mrb[0].mxu0
        %v476 = vadd.f32 0.0, %v475
        %v477 = vpop.f32.mrb[0].mxu0
        %478 = vmatprep.mubr.bf16.mxu0 0
        %479 = vmatmul.mubr.bf16.gmra.mrb[0].mxu0 %v388
        %v480 = vpop.f32.mrb[0].mxu0
        %v481 = vadd.f32 0.0, %v480
        %v482 = vpop.f32.mrb[0].mxu0
        %v483 = vpop.f32.mrb[0].mxu0
        %v484 = vadd.f32 0.0, %v483
        %v485 = vpop.f32.mrb[0].mxu0
        %486 = vdwg.mxu0
        %v487 = vadd.f32 %v341, %v425
        %v488 = vadd.f32 %v342, %v428
        %v489 = vadd.f32 %v343, %v433
        %v490 = vadd.f32 %v344, %v436
        %v491 = vadd.f32 %v345, %v441
        %v492 = vadd.f32 %v346, %v444
        %v493 = vadd.f32 %v347, %v449
        %v494 = vadd.f32 %v348, %v452
        %v495 = vadd.f32 %v349, %v457
        %v496 = vadd.f32 %v350, %v460
        %v497 = vadd.f32 %v351, %v465
        %v498 = vadd.f32 %v352, %v468
        %v499 = vadd.f32 %v353, %v473
        %v500 = vadd.f32 %v354, %v476
        %v501 = vadd.f32 %v355, %v481
        %v502 = vadd.f32 %v356, %v484
        %503 = vst [vmem:[%s220] sm:$0xff] %v487
        %504 = vst [vmem:[%s220 + $0x8] sm:$0xff] %v488
        %505 = vst [vmem:[%s220 + $0x10] sm:$0xff] %v489
        %506 = vst [vmem:[%s220 + $0x18] sm:$0xff] %v490
        %507 = vst [vmem:[%s220 + $0x20] sm:$0xff] %v491
        %508 = vst [vmem:[%s220 + $0x28] sm:$0xff] %v492
        %509 = vst [vmem:[%s220 + $0x30] sm:$0xff] %v493
        %510 = vst [vmem:[%s220 + $0x38] sm:$0xff] %v494
        %511 = vst [vmem:[%s220 + $0x40] sm:$0xff] %v495
        %512 = vst [vmem:[%s220 + $0x48] sm:$0xff] %v496
        %513 = vst [vmem:[%s220 + $0x50] sm:$0xff] %v497
        %514 = vst [vmem:[%s220 + $0x58] sm:$0xff] %v498
        %515 = vst [vmem:[%s220 + $0x60] sm:$0xff] %v499
        %516 = vst [vmem:[%s220 + $0x68] sm:$0xff] %v500
        %517 = vst [vmem:[%s220 + $0x70] sm:$0xff] %v501
        %518 = vst [vmem:[%s220 + $0x78] sm:$0xff] %v502
        // Predicated region
        $region37: #{tpu_custom_call.1} parent=31 // pred_check
          %p519 = pneg %p243
        $region38: #{tpu_custom_call.1} parent=31 // pred_check_branch
          %521 = sbr.rel (%p519) target = $region40
        $region39: #{tpu_custom_call.1} parent=31 // pred_region
          %v522 = vld [vmem:[%s220] sm:$0xff]
          %v523 = vld [vmem:[%s220 + $0x8] sm:$0xff]
          %v524 = vld [vmem:[%s220 + $0x10] sm:$0xff]
          %v525 = vld [vmem:[%s220 + $0x18] sm:$0xff]
          %v526 = vld [vmem:[%s220 + $0x20] sm:$0xff]
          %v527 = vld [vmem:[%s220 + $0x28] sm:$0xff]
          %v528 = vld [vmem:[%s220 + $0x30] sm:$0xff]
          %v529 = vld [vmem:[%s220 + $0x38] sm:$0xff]
          %v530 = vld [vmem:[%s220 + $0x40] sm:$0xff]
          %v531 = vld [vmem:[%s220 + $0x48] sm:$0xff]
          %v532 = vld [vmem:[%s220 + $0x50] sm:$0xff]
          %v533 = vld [vmem:[%s220 + $0x58] sm:$0xff]
          %v534 = vld [vmem:[%s220 + $0x60] sm:$0xff]
          %v535 = vld [vmem:[%s220 + $0x68] sm:$0xff]
          %v536 = vld [vmem:[%s220 + $0x70] sm:$0xff]
          %v537 = vld [vmem:[%s220 + $0x78] sm:$0xff]
          %v538 = vld [vmem:[%s231] sm:$0xff]
          %v539 = vld [vmem:[%s231 + $0x8] sm:$0xff]
          %v540 = vld [vmem:[%s231 + $0x10] sm:$0xff]
          %v541 = vld [vmem:[%s231 + $0x18] sm:$0xff]
          %v542 = vld [vmem:[%s231 + $0x20] sm:$0xff]
          %v543 = vld [vmem:[%s231 + $0x28] sm:$0xff]
          %v544 = vld [vmem:[%s231 + $0x30] sm:$0xff]
          %v545 = vld [vmem:[%s231 + $0x38] sm:$0xff]
          %v546 = vld [vmem:[%s231 + $0x40] sm:$0xff]
          %v547 = vld [vmem:[%s231 + $0x48] sm:$0xff]
          %v548 = vld [vmem:[%s231 + $0x50] sm:$0xff]
          %v549 = vld [vmem:[%s231 + $0x58] sm:$0xff]
          %v550 = vld [vmem:[%s231 + $0x60] sm:$0xff]
          %v551 = vld [vmem:[%s231 + $0x68] sm:$0xff]
          %v552 = vld [vmem:[%s231 + $0x70] sm:$0xff]
          %v553 = vld [vmem:[%s231 + $0x78] sm:$0xff]
          %555 = vset.pattern.permute.xlu0 0
          %556 = vperm.xlu0 %555, %v538
          %v557 = vpop.permute.xlu0 %556
          %560 = vset.pattern.permute.xlu0 0
          %561 = vperm.xlu0 %560, %v539
          %v562 = vpop.permute.xlu0 %561
          %565 = vset.pattern.permute.xlu0 0
          %566 = vperm.xlu0 %565, %v540
          %v567 = vpop.permute.xlu0 %566
          %570 = vset.pattern.permute.xlu0 0
          %571 = vperm.xlu0 %570, %v541
          %v572 = vpop.permute.xlu0 %571
          %575 = vset.pattern.permute.xlu0 0
          %576 = vperm.xlu0 %575, %v542
          %v577 = vpop.permute.xlu0 %576
          %580 = vset.pattern.permute.xlu0 0
          %581 = vperm.xlu0 %580, %v543
          %v582 = vpop.permute.xlu0 %581
          %585 = vset.pattern.permute.xlu0 0
          %586 = vperm.xlu0 %585, %v544
          %v587 = vpop.permute.xlu0 %586
          %590 = vset.pattern.permute.xlu0 0
          %591 = vperm.xlu0 %590, %v545
          %v592 = vpop.permute.xlu0 %591
          %595 = vset.pattern.permute.xlu0 0
          %596 = vperm.xlu0 %595, %v546
          %v597 = vpop.permute.xlu0 %596
          %600 = vset.pattern.permute.xlu0 0
          %601 = vperm.xlu0 %600, %v547
          %v602 = vpop.permute.xlu0 %601
          %605 = vset.pattern.permute.xlu0 0
          %606 = vperm.xlu0 %605, %v548
          %v607 = vpop.permute.xlu0 %606
          %610 = vset.pattern.permute.xlu0 0
          %611 = vperm.xlu0 %610, %v549
          %v612 = vpop.permute.xlu0 %611
          %615 = vset.pattern.permute.xlu0 0
          %616 = vperm.xlu0 %615, %v550
          %v617 = vpop.permute.xlu0 %616
          %620 = vset.pattern.permute.xlu0 0
          %621 = vperm.xlu0 %620, %v551
          %v622 = vpop.permute.xlu0 %621
          %625 = vset.pattern.permute.xlu0 0
          %626 = vperm.xlu0 %625, %v552
          %v627 = vpop.permute.xlu0 %626
          %630 = vset.pattern.permute.xlu0 0
          %631 = vperm.xlu0 %630, %v553
          %v632 = vpop.permute.xlu0 %631
          %v634 = vmul.f32 %v522, %v557
          %v635 = vmul.f32 %v523, %v562
          %v636 = vmul.f32 %v524, %v567
          %v637 = vmul.f32 %v525, %v572
          %v638 = vmul.f32 %v526, %v577
          %v639 = vmul.f32 %v527, %v582
          %v640 = vmul.f32 %v528, %v587
          %v641 = vmul.f32 %v529, %v592
          %v642 = vmul.f32 %v530, %v597
          %v643 = vmul.f32 %v531, %v602
          %v644 = vmul.f32 %v532, %v607
          %v645 = vmul.f32 %v533, %v612
          %v646 = vmul.f32 %v534, %v617
          %v647 = vmul.f32 %v535, %v622
          %v648 = vmul.f32 %v536, %v627
          %v649 = vmul.f32 %v537, %v632
          %650 = vst [vmem:[%s220] sm:$0xff] %v634
          %651 = vst [vmem:[%s220 + $0x8] sm:$0xff] %v635
          %652 = vst [vmem:[%s220 + $0x10] sm:$0xff] %v636
          %653 = vst [vmem:[%s220 + $0x18] sm:$0xff] %v637
          %654 = vst [vmem:[%s220 + $0x20] sm:$0xff] %v638
          %655 = vst [vmem:[%s220 + $0x28] sm:$0xff] %v639
          %656 = vst [vmem:[%s220 + $0x30] sm:$0xff] %v640
          %657 = vst [vmem:[%s220 + $0x38] sm:$0xff] %v641
          %658 = vst [vmem:[%s220 + $0x40] sm:$0xff] %v642
          %659 = vst [vmem:[%s220 + $0x48] sm:$0xff] %v643
          %660 = vst [vmem:[%s220 + $0x50] sm:$0xff] %v644
          %661 = vst [vmem:[%s220 + $0x58] sm:$0xff] %v645
          %662 = vst [vmem:[%s220 + $0x60] sm:$0xff] %v646
          %663 = vst [vmem:[%s220 + $0x68] sm:$0xff] %v647
          %664 = vst [vmem:[%s220 + $0x70] sm:$0xff] %v648
          %665 = vst [vmem:[%s220 + $0x78] sm:$0xff] %v649
        $region40: #{tpu_custom_call.1} parent=31 // pred_fallthru
          _
        %s666 = sand.u32 %s119, 1
        %s667 = scalar_lea.sflag [#allocation3], %s666
        %s668 = sand.u32 %s119, 1
        %s669 = smul.addr %s668, 128
        %s670 = scalar_lea.vmem [#allocation2], %s669
        // Predicated region
        $region41: #{tpu_custom_call.1} parent=31 // pred_check
          %p671 = pneg %p129
        $region42: #{tpu_custom_call.1} parent=31 // pred_check_branch
          %673 = sbr.rel (%p671) target = $region44
        $region43: #{tpu_custom_call.1} parent=31 // pred_region
          %s675 = ssub.s32 2048, 2048
          %676 = vsyncadd %s667, %s675
          %s677 = smul.addr %s21, 16
          %s678 = smul.addr %s677, 128
          %s679 = scalar_lea.hbm %s3, %s678
          %s680 = sshll.u32 %s670, 4
          %s681 = int_to_ptr.vmem [resolvable:$true] %s680
          %686 = dma.vmem_to_hbm [thread:$0]  %s681, 2048, %s679, %s667, 128, 128, 8
        $region44: #{tpu_custom_call.1} parent=31 // pred_fallthru
          _
      $region32: #{tpu_custom_call.1} parent=5 // pred_fallthru
        _
      %p687 = scmp.le.s32.totalorder 2, %s12
      // Predicated region
      $region45: #{tpu_custom_call.1} parent=5 // pred_check
        %p688 = pneg %p687
      $region46: #{tpu_custom_call.1} parent=5 // pred_check_branch
        %690 = sbr.rel (%p688) target = $region48
      $region47: #{tpu_custom_call.1} parent=5 // pred_region
        %s691 = ssub.s32 %s12, 2
        // Predicated region
        $region49: #{tpu_custom_call.1} parent=47 // pred_check
          %p692 = pneg %p135
        $region50: #{tpu_custom_call.1} parent=47 // pred_check_branch
          %694 = sbr.rel (%p692) target = $region52
        $region51: #{tpu_custom_call.1} parent=47 // pred_region
          %s695 = sand.u32 %s120, 1
          %s696 = scalar_lea.sflag [#allocation3], %s695
          %s697 = sand.u32 %s120, 1
          %s698 = smul.addr %s697, 128
          %s699 = scalar_lea.vmem [#allocation2], %s698
          %700 = dma.done %s696, 2048
        $region52: #{tpu_custom_call.1} parent=47 // pred_fallthru
          _
      $region48: #{tpu_custom_call.1} parent=5 // pred_fallthru
        _
    $region6: #{tpu_custom_call.1} parent=1 // loop_footer
      %s16 = sadd.s32 1, %s12
    $region7: #{tpu_custom_call.1} parent=1 // loop_footer_branch
      %11 = sbr.rel target = $region3
    $region8: #{tpu_custom_call.1} parent=1 // loop_exit
      _
    %701 = vsyncpa [#allocation3], 1
    %s702 = scalar_lea.sflag [#allocation3], 1
    %703 = vsyncpa %s702, 1

</llo_original>
